<compile_context>
chip_gen: v7x
topology: tpu7x:2x2x1
jax: 0.10.0
libtpu: 0.0.40
codegen_flags: <defaults>
</compile_context>

<pallas_src>
import functools

import jax
import jax.numpy as jnp
from jax.experimental import pallas as pl
from jax.experimental.pallas import tpu as pltpu


# ----------------------------------------------------------------------------
# Pass A: 3x3 conv (taps folded into one big-K MXU matmul) + bias + Dropout2d
#         (pre-folded into per-image weights), emitting the pre-norm activation
#         y in a lane-dense (Cout, M) layout plus per-image, per-channel
#         sum / sum-of-squares for training-mode BatchNorm.
# ----------------------------------------------------------------------------
def _conv_bias_drop_stats_kernel(xcol_ref, w_ref, b_ref,
                                 y_ref, ssum_ref, ssq_ref):
    """grid = (N, HW // TM); axis 0 "parallel", axis 1 "arbitrary".

    xcol_ref : (Kp, TM)       bf16  im2col tile, K = 9*Cin zero-padded to Kp
    w_ref    : (1, Cout, Kp)  bf16  per-image weights, pre-scaled by dropout mask
    b_ref    : (1, Cout, 1)   f32   per-image bias, pre-scaled by dropout mask
    y_ref    : (Cout, TM)     f32   conv + bias + dropout output tile
    ssum_ref : (1, Cout, 1)   f32   per-image resident accumulator over axis 1
    ssq_ref  : (1, Cout, 1)   f32   per-image resident accumulator over axis 1
    """
    @pl.when(pl.program_id(1) == 0)
    def _init():
        ssum_ref[...] = jnp.zeros_like(ssum_ref)
        ssq_ref[...] = jnp.zeros_like(ssq_ref)

    # Single MXU matmul with all 9 taps folded into K (bf16 in, f32 accumulate),
    # producing a lane-dense (Cout, TM) slab.
    acc = jnp.dot(w_ref[0], xcol_ref[...], preferred_element_type=jnp.float32)
    acc = acc + b_ref[0]                      # bias (already dropout-scaled)
    y_ref[...] = acc

    # Per-image, per-channel partial statistics for training-mode BatchNorm2d.
    # NOTE: sum/sumsq (E[x^2]-E[x]^2) is fine at these sizes; for M in the
    # millions switch to per-tile (count, mean, M2) combination.
    ssum_ref[0] += jnp.sum(acc, axis=1, keepdims=True)
    ssq_ref[0] += jnp.sum(acc * acc, axis=1, keepdims=True)


# ----------------------------------------------------------------------------
# Pass B: z = y * scale + shift, then LeakyReLU. scale/shift are the BN batch
#         statistics folded with the affine params -> one FMA per element.
# ----------------------------------------------------------------------------
def _bn_lrelu_kernel(y_ref, scale_ref, shift_ref, o_ref, *, neg_slope):
    z = y_ref[...] * scale_ref[...] + shift_ref[...]
    o_ref[...] = jnp.where(z >= 0.0, z, neg_slope * z)


def _pick_tile_m(total, cap):
    """Largest multiple of 128 <= cap that divides `total`."""
    c = (min(cap, total) // 128) * 128
    while c >= 128:
        if total % c == 0:
            return c
        c -= 128
    raise ValueError(f"size {total} must be a multiple of 128 for lane-dense tiling.")


def conv_dropout_norm_nonlin(x_nchw, weight, bias, gamma, beta, drop_mask,
                             eps=1e-5, neg_slope=0.01, tile_m=2048):
    """Forward of nnUNet ConvDropoutNormNonlin (training mode).

    x_nchw   : (N, Cin, H, W) f32
    weight   : (Cout, Cin, 3, 3) f32;  bias/gamma/beta: (Cout,) f32
    drop_mask: (N, Cout) f32 Dropout2d channel mask, values in {0, 1/(1-p)}
    returns  : (N, Cout, H, W) f32
    """
    N, Cin, H, W = x_nchw.shape
    Cout = weight.shape[0]
    HW = H * W
    M = N * HW
    K = 9 * Cin
    Kp = ((K + 7) // 8) * 8          # pad contraction to a multiple of 8 sublanes

    tm = _pick_tile_m(HW, tile_m)    # pass-A tile: never crosses an image
    n_j = HW // tm                   # M-tiles per image

    # ---- glue (plain JAX): folded + transposed im2col, channels-major ----
    # xcol[t*Cin + ci, n*HW + h*W + w] = xpad[n, ci, h+kh, w+kw],  t = kh*3 + kw
    xp = jnp.pad(x_nchw, ((0, 0), (0, 0), (1, 1), (1, 1)))
    taps = [xp[:, :, kh:kh + H, kw:kw + W]             # (N, Cin, H, W)
            for kh in range(3) for kw in range(3)]
    xcol = jnp.stack(taps, axis=0)                     # (9, N, Cin, H, W)
    xcol = jnp.transpose(xcol, (0, 2, 1, 3, 4)).reshape(K, M)
    if Kp != K:
        xcol = jnp.pad(xcol, ((0, Kp - K), (0, 0)))
    xcol = xcol.astype(jnp.bfloat16)                   # bf16 MXU inputs
    # TODO(synk): the im2col above still replicates the input ~9x through HBM
    # (halved by bf16); a halo-windowed in-kernel tap construction would remove it.

    # Weights folded to (Cout, 9*Cin) and, together with the bias, pre-scaled by
    # the per-image Dropout2d mask -> no (M, Cout) mask is ever materialized.
    w2 = jnp.transpose(weight, (0, 2, 3, 1)).reshape(Cout, K)
    if Kp != K:
        w2 = jnp.pad(w2, ((0, 0), (0, Kp - K)))
    mask = drop_mask.astype(jnp.float32)                                   # (N, Cout)
    w_eff = (w2[None, :, :] * mask[:, :, None]).astype(jnp.bfloat16)       # (N, Cout, Kp)
    b_eff = (bias.astype(jnp.float32)[None, :] * mask)[:, :, None]         # (N, Cout, 1)

    # ---- pass A: conv + bias + dropout, y + per-image BN statistics ----
    cparams_a = pltpu.CompilerParams(
        dimension_semantics=("parallel", "arbitrary"),   # per-image accumulators
        vmem_limit_bytes=32 * 1024 * 1024,
    )
    cost_a = pl.CostEstimate(
        flops=2 * M * Kp * Cout,
        transcendentals=0,
        bytes_accessed=(Kp * M * 2 + N * Cout * (Kp * 2 + 4)
                        + Cout * M * 4 + 2 * N * Cout * 4),
    )
    y, ssum_img, ssq_img = pl.pallas_call(
        _conv_bias_drop_stats_kernel,
        out_shape=(
            jax.ShapeDtypeStruct((Cout, M), jnp.float32),
            jax.ShapeDtypeStruct((N, Cout, 1), jnp.float32),
            jax.ShapeDtypeStruct((N, Cout, 1), jnp.float32),
        ),
        grid=(N, n_j),
        in_specs=[
            pl.BlockSpec((Kp, tm), lambda n, j: (0, n * n_j + j)),
            pl.BlockSpec((1, Cout, Kp), lambda n, j: (n, 0, 0)),
            pl.BlockSpec((1, Cout, 1), lambda n, j: (n, 0, 0)),
        ],
        out_specs=(
            pl.BlockSpec((Cout, tm), lambda n, j: (0, n * n_j + j)),
            pl.BlockSpec((1, Cout, 1), lambda n, j: (n, 0, 0)),
            pl.BlockSpec((1, Cout, 1), lambda n, j: (n, 0, 0)),
        ),
        compiler_params=cparams_a,
        cost_estimate=cost_a,
    )(xcol, w_eff, b_eff)

    # ---- BatchNorm2d (training) stats -> per-channel scale / shift (tiny) ----
    ssum = jnp.sum(ssum_img, axis=0)                         # (Cout, 1)
    ssq = jnp.sum(ssq_img, axis=0)                           # (Cout, 1)
    inv_m = 1.0 / float(M)
    mean = ssum * inv_m                                      # (Cout, 1)
    var = jnp.maximum(ssq * inv_m - mean * mean, 0.0)        # biased, as torch
    scale = gamma.astype(jnp.float32).reshape(Cout, 1) * jax.lax.rsqrt(var + eps)
    shift = beta.astype(jnp.float32).reshape(Cout, 1) - mean * scale
    # TODO(synk): BatchNorm running_mean/running_var (momentum=0.1) updates are a
    # training side effect with no forward output; not materialized here.

    # ---- pass B: normalize + affine + LeakyReLU (memory-bound, "parallel") ----
    tmb = _pick_tile_m(M, 2 * tile_m)                # may span image boundaries
    cparams_b = pltpu.CompilerParams(
        dimension_semantics=("parallel",),
        vmem_limit_bytes=32 * 1024 * 1024,
    )
    cost_b = pl.CostEstimate(
        flops=3 * M * Cout, transcendentals=0,
        bytes_accessed=2 * Cout * M * 4 + 2 * Cout * 4)
    out_cm = pl.pallas_call(
        functools.partial(_bn_lrelu_kernel, neg_slope=float(neg_slope)),
        out_shape=jax.ShapeDtypeStruct((Cout, M), jnp.float32),
        grid=(M // tmb,),
        in_specs=[
            pl.BlockSpec((Cout, tmb), lambda i: (0, i)),
            pl.BlockSpec((Cout, 1), lambda i: (0, 0)),
            pl.BlockSpec((Cout, 1), lambda i: (0, 0)),
        ],
        out_specs=pl.BlockSpec((Cout, tmb), lambda i: (0, i)),
        compiler_params=cparams_b,
        cost_estimate=cost_b,
    )(y, scale, shift)

    # ---- glue: (Cout, N*H*W) -> NCHW ----
    return jnp.transpose(out_cm.reshape(Cout, N, H, W), (1, 0, 2, 3))


def _reference(x, weight, bias, gamma, beta, drop_mask, eps=1e-5, ns=0.01):
    """Pure-JAX reference mirroring the PyTorch forward (same dropout mask)."""
    y = jax.lax.conv_general_dilated(
        x, weight, window_strides=(1, 1), padding=((1, 1), (1, 1)),
        dimension_numbers=("NCHW", "OIHW", "NCHW"),
        precision=jax.lax.Precision.HIGHEST)
    y = y + bias[None, :, None, None]
    y = y * drop_mask[:, :, None, None]
    mean = jnp.mean(y, axis=(0, 2, 3), keepdims=True)
    var = jnp.mean((y - mean) ** 2, axis=(0, 2, 3), keepdims=True)
    z = (y - mean) / jnp.sqrt(var + eps)
    z = z * gamma[None, :, None, None] + beta[None, :, None, None]
    return jnp.where(z >= 0.0, z, ns * z)


if __name__ == "__main__":
    key = jax.random.PRNGKey(0)
    kx, kw, kb, kg, kbe, kd = jax.random.split(key, 6)

    N, Cin, Cout, H, W = 2, 4, 8, 16, 16
    x = jax.random.normal(kx, (N, Cin, H, W), jnp.float32)

    # Deterministic parameter init (shapes per Conv2d(4, 8, 3) / BatchNorm2d(8)).
    fan_in = Cin * 3 * 3
    weight = jax.random.normal(kw, (Cout, Cin, 3, 3), jnp.float32) / jnp.sqrt(
        jnp.float32(fan_in))
    bias = 0.1 * jax.random.normal(kb, (Cout,), jnp.float32)
    # BatchNorm2d default init is gamma=1, beta=0; perturb slightly so the
    # affine path is actually exercised by the check.
    gamma = 1.0 + 0.1 * jax.random.normal(kg, (Cout,), jnp.float32)
    beta = 0.1 * jax.random.normal(kbe, (Cout,), jnp.float32)

    # Dropout2d training mask (p=0.5): keep whole (n, c) maps w.p. 1-p, scale
    # kept maps by 1/(1-p). Seeded with the JAX PRNG (bit-exact replication of
    # torch's RNG stream is not possible).
    p = 0.5
    keep = jax.random.bernoulli(kd, 1.0 - p, (N, Cout)).astype(jnp.float32)
    drop_mask = keep / (1.0 - p)

    out = conv_dropout_norm_nonlin(x, weight, bias, gamma, beta, drop_mask)
    out = jax.block_until_ready(out)
    assert out.shape == (N, Cout, H, W)

    ref = _reference(x, weight, bias, gamma, beta, drop_mask)
    max_err = float(jnp.max(jnp.abs(out - ref)))
    # bf16 MXU inputs (f32 accumulate) bound the error well inside this tol.
    if not (max_err < 5e-2):
        raise AssertionError(f"kernel mismatch vs reference: max_err={max_err}")

    print("KERNEL_OK")
</pallas_src>

<mosaic_0001>
module attributes {stable_mosaic.version = 11 : i64} {
  func.func @_conv_bias_drop_stats_kernel(%arg0: i32, %arg1: i32, %arg2: memref<40x256xbf16, #tpu.memory_space<vmem>>, %arg3: memref<1x8x40xbf16, #tpu.memory_space<vmem>>, %arg4: memref<1x8x1xf32, #tpu.memory_space<vmem>>, %arg5: memref<8x256xf32, #tpu.memory_space<vmem>>, %arg6: memref<1x8x1xf32, #tpu.memory_space<vmem>>, %arg7: memref<1x8x1xf32, #tpu.memory_space<vmem>>) attributes {dimension_semantics = [#tpu.dimension_semantics<parallel>, #tpu.dimension_semantics<arbitrary>], iteration_bounds = array<i64: 2, 1>, scalar_prefetch = 0 : i64, scratch_operands = 0 : i64, tpu.core_type = #tpu.core_type<tc>, window_params = [{transform_indices = @transform_0, window_bounds = array<i64: 40, 256>}, {transform_indices = @transform_1, window_bounds = array<i64: 1, 8, 40>}, {transform_indices = @transform_2, window_bounds = array<i64: 1, 8, 1>}, {transform_indices = @transform_3, window_bounds = array<i64: 8, 256>}, {transform_indices = @transform_4, window_bounds = array<i64: 1, 8, 1>}, {transform_indices = @transform_5, window_bounds = array<i64: 1, 8, 1>}]} {
    %c0_i32 = arith.constant 0 : i32
    %0 = arith.cmpi eq, %arg1, %c0_i32 : i32
    %1 = arith.extui %0 : i1 to i32
    %c0_i32_0 = arith.constant 0 : i32
    %2 = arith.cmpi ne, %1, %c0_i32_0 : i32
    scf.if %2 {
      %cst_24 = arith.constant 0.000000e+00 : f32
      %29 = vector.broadcast %cst_24 : f32 to vector<1x8x1xf32>
      %c0_25 = arith.constant 0 : index
      %c0_26 = arith.constant 0 : index
      %c0_27 = arith.constant 0 : index
      %30 = vector.load %arg6[%c0_25, %c0_26, %c0_27] : memref<1x8x1xf32, #tpu.memory_space<vmem>>, vector<1x8x1xf32>
      tpu.vector_store %arg6[%c0_25, %c0_26, %c0_27], %29 {strides = array<i32>} : memref<1x8x1xf32, #tpu.memory_space<vmem>>, vector<1x8x1xf32>,
      %cst_28 = arith.constant 0.000000e+00 : f32
      %31 = vector.broadcast %cst_28 : f32 to vector<1x8x1xf32>
      %c0_29 = arith.constant 0 : index
      %c0_30 = arith.constant 0 : index
      %c0_31 = arith.constant 0 : index
      %32 = vector.load %arg7[%c0_29, %c0_30, %c0_31] : memref<1x8x1xf32, #tpu.memory_space<vmem>>, vector<1x8x1xf32>
      tpu.vector_store %arg7[%c0_29, %c0_30, %c0_31], %31 {strides = array<i32>} : memref<1x8x1xf32, #tpu.memory_space<vmem>>, vector<1x8x1xf32>,
    } else {
    }
    %c0 = arith.constant 0 : index
    %c0_1 = arith.constant 0 : index
    %c0_2 = arith.constant 0 : index
    %3 = vector.load %arg3[%c0, %c0_1, %c0_2] : memref<1x8x40xbf16, #tpu.memory_space<vmem>>, vector<1x8x40xbf16>
    %4 = vector.shape_cast %3 : vector<1x8x40xbf16> to vector<8x40xbf16>
    %c0_3 = arith.constant 0 : index
    %c0_4 = arith.constant 0 : index
    %5 = vector.load %arg2[%c0_3, %c0_4] : memref<40x256xbf16, #tpu.memory_space<vmem>>, vector<40x256xbf16>
    %cst = arith.constant dense<0.000000e+00> : vector<8x256xf32>
    %6 = tpu.matmul %4, %5, %cst {dimension_numbers = #tpu.dot_dimension_numbers<[1], [0], [0], [1], [0, 0, 1, 1], [], []>} : vector<8x40xbf16>, vector<40x256xbf16>, vector<8x256xf32> -> vector<8x256xf32>
    %c0_5 = arith.constant 0 : index
    %c0_6 = arith.constant 0 : index
    %c0_7 = arith.constant 0 : index
    %7 = vector.load %arg4[%c0_5, %c0_6, %c0_7] : memref<1x8x1xf32, #tpu.memory_space<vmem>>, vector<1x8x1xf32>
    %8 = vector.shape_cast %7 : vector<1x8x1xf32> to vector<8x1xf32>
    %9 = vector.broadcast %8 : vector<8x1xf32> to vector<8x256xf32>
    %10 = arith.addf %6, %9 : vector<8x256xf32>
    %c0_8 = arith.constant 0 : index
    %c0_9 = arith.constant 0 : index
    %11 = vector.load %arg5[%c0_8, %c0_9] : memref<8x256xf32, #tpu.memory_space<vmem>>, vector<8x256xf32>
    tpu.vector_store %arg5[%c0_8, %c0_9], %10 {strides = array<i32>} : memref<8x256xf32, #tpu.memory_space<vmem>>, vector<8x256xf32>,
    %c0_10 = arith.constant 0 : index
    %c0_11 = arith.constant 0 : index
    %c0_12 = arith.constant 0 : index
    %12 = vector.load %arg6[%c0_10, %c0_11, %c0_12] : memref<1x8x1xf32, #tpu.memory_space<vmem>>, vector<1x8x1xf32>
    %13 = vector.shape_cast %12 : vector<1x8x1xf32> to vector<8x1xf32>
    %cst_13 = arith.constant dense<0.000000e+00> : vector<8xf32>
    %14 = vector.multi_reduction <add>, %10, %cst_13 [1] : vector<8x256xf32> to vector<8xf32>
    %15 = vector.shape_cast %14 : vector<8xf32> to vector<8x1xf32>
    %16 = arith.addf %13, %15 : vector<8x1xf32>
    %c0_14 = arith.constant 0 : index
    %c0_15 = arith.constant 0 : index
    %c0_16 = arith.constant 0 : index
    %17 = vector.load %arg6[%c0_14, %c0_15, %c0_16] : memref<1x8x1xf32, #tpu.memory_space<vmem>>, vector<1x8x1xf32>
    %18 = vector.shape_cast %17 : vector<1x8x1xf32> to vector<8x1xf32>
    %19 = vector.shape_cast %16 : vector<8x1xf32> to vector<1x8x1xf32>
    tpu.vector_store %arg6[%c0_14, %c0_15, %c0_16], %19 {strides = array<i32>} : memref<1x8x1xf32, #tpu.memory_space<vmem>>, vector<1x8x1xf32>,
    %c0_17 = arith.constant 0 : index
    %c0_18 = arith.constant 0 : index
    %c0_19 = arith.constant 0 : index
    %20 = vector.load %arg7[%c0_17, %c0_18, %c0_19] : memref<1x8x1xf32, #tpu.memory_space<vmem>>, vector<1x8x1xf32>
    %21 = vector.shape_cast %20 : vector<1x8x1xf32> to vector<8x1xf32>
    %22 = arith.mulf %10, %10 : vector<8x256xf32>
    %cst_20 = arith.constant dense<0.000000e+00> : vector<8xf32>
    %23 = vector.multi_reduction <add>, %22, %cst_20 [1] : vector<8x256xf32> to vector<8xf32>
    %24 = vector.shape_cast %23 : vector<8xf32> to vector<8x1xf32>
    %25 = arith.addf %21, %24 : vector<8x1xf32>
    %c0_21 = arith.constant 0 : index
    %c0_22 = arith.constant 0 : index
    %c0_23 = arith.constant 0 : index
    %26 = vector.load %arg7[%c0_21, %c0_22, %c0_23] : memref<1x8x1xf32, #tpu.memory_space<vmem>>, vector<1x8x1xf32>
    %27 = vector.shape_cast %26 : vector<1x8x1xf32> to vector<8x1xf32>
    %28 = vector.shape_cast %25 : vector<8x1xf32> to vector<1x8x1xf32>
    tpu.vector_store %arg7[%c0_21, %c0_22, %c0_23], %28 {strides = array<i32>} : memref<1x8x1xf32, #tpu.memory_space<vmem>>, vector<1x8x1xf32>,
    return
  }
  func.func @transform_0(%arg0: i32, %arg1: i32) -> (i32, i32) {
    %c1_i32 = arith.constant 1 : i32
    %0 = arith.muli %arg0, %c1_i32 : i32
    %1 = arith.addi %0, %arg1 : i32
    %c0_i32 = arith.constant 0 : i32
    %c0_i32_0 = arith.constant 0 : i32
    return %c0_i32, %1 : i32, i32
  }
  func.func @transform_1(%arg0: i32, %arg1: i32) -> (i32, i32, i32) {
    %c0_i32 = arith.constant 0 : i32
    %c0_i32_0 = arith.constant 0 : i32
    %c0_i32_1 = arith.constant 0 : i32
    return %arg0, %c0_i32, %c0_i32_0 : i32, i32, i32
  }
  func.func @transform_2(%arg0: i32, %arg1: i32) -> (i32, i32, i32) {
    %c0_i32 = arith.constant 0 : i32
    %c0_i32_0 = arith.constant 0 : i32
    %c0_i32_1 = arith.constant 0 : i32
    return %arg0, %c0_i32, %c0_i32_0 : i32, i32, i32
  }
  func.func @transform_3(%arg0: i32, %arg1: i32) -> (i32, i32) {
    %c1_i32 = arith.constant 1 : i32
    %0 = arith.muli %arg0, %c1_i32 : i32
    %1 = arith.addi %0, %arg1 : i32
    %c0_i32 = arith.constant 0 : i32
    %c0_i32_0 = arith.constant 0 : i32
    return %c0_i32, %1 : i32, i32
  }
  func.func @transform_4(%arg0: i32, %arg1: i32) -> (i32, i32, i32) {
    %c0_i32 = arith.constant 0 : i32
    %c0_i32_0 = arith.constant 0 : i32
    %c0_i32_1 = arith.constant 0 : i32
    return %arg0, %c0_i32, %c0_i32_0 : i32, i32, i32
  }
  func.func @transform_5(%arg0: i32, %arg1: i32) -> (i32, i32, i32) {
    %c0_i32 = arith.constant 0 : i32
    %c0_i32_0 = arith.constant 0 : i32
    %c0_i32_1 = arith.constant 0 : i32
    return %arg0, %c0_i32, %c0_i32_0 : i32, i32, i32
  }
}

</mosaic_0001>

<llo_original>
// kernel: tpu_custom_call.1
$region0: #{tpu_custom_call.1}
  #allocation0 [shape = 'u32[]', space=smem, size = 0x4, offset = 0x4, fixed_abs, tag = 'smem constant byte address 0x4 - core index']
  #allocation1 [shape = 'u32[144,128]{1,0:T(1,128)}', space=vmem, size = 0x12000, scoped, tag = 'internal scratch']
  %s0 = inlined_call_operand.hbm [shape: bf16[40,512], index: 0, kind: input, shape index: {}]
  %s1 = inlined_call_operand.vmem [shape: bf16[2,8,40], index: 1, kind: input, shape index: {}]
  %s2 = inlined_call_operand.vmem [shape: f32[2,8,1], index: 2, kind: input, shape index: {}]
  %s3 = inlined_call_operand.hbm [shape: f32[8,512], index: 3, kind: output, shape index: {0}]
  %s4 = inlined_call_operand.vmem [shape: f32[2,8,1], index: 4, kind: output, shape index: {1}]
  %s5 = inlined_call_operand.vmem [shape: f32[2,8,1], index: 5, kind: output, shape index: {2}]
  %6 = xla_tuple %s3, %s4, %s5
  %s7 = sld [smem:[#allocation0]]
  $region69: #{tpu_custom_call.1} parent=0
    _
  %s9 = ssub.s32 1, %s7
  %s10 = scalar_select 0, %s9, %s7
  $region1: #{tpu_custom_call.1} parent=0
    #allocation2 [shape = 'u8[40960]{0}', space=vmem, size = 0xa000, scoped, tag = 'input window, operand 0']
    #allocation3 [shape = 's32[2]{0}', space=sflag, size = 0x8, scoped, tag = 'scoped memory for tpu_custom_call.1']
    #allocation4 [shape = 's32[2]{0}', space=sflag, size = 0x8, scoped, tag = 'scoped memory for tpu_custom_call.1']
    #allocation5 [shape = 'u8[16384]{0}', space=vmem, size = 0x4000, scoped, tag = 'output window, operand 0']
    %11 = vsyncpa [#allocation3], 0
    %s12 = scalar_lea.sflag [#allocation3], 1
    %13 = vsyncpa %s12, 0
    %14 = vsyncpa [#allocation4], 0
    %s15 = scalar_lea.sflag [#allocation4], 1
    %16 = vsyncpa %s15, 0
    loop: start=0, step=1, limit=4
    $region2: #{tpu_custom_call.1} parent=1 // loop_pre_header
      _
    $region3: #{tpu_custom_call.1} parent=1 // loop_header
      %s18 = sphi 0, %s22
      %p19 = scmp.ge.s32.totalorder %s18, 4
      %s25 = sphi 0, %s37
      %s26 = sphi 0, %s33
      %s27 = sphi 0, %s25
      %s28 = sphi 0, %s26
      %s29 = sphi 0, %s27
      %s30 = sphi 0, %s28
      %s42 = sphi 0, %s44
      %s45 = sphi 0, %s42
      %s46 = sphi 0, %s45
      %s62 = sphi 0, %s46
      %s68 = sphi 0, %s70
      %s71 = sphi 0, %s68
      %s72 = sphi 0, %s71
      %s88 = sphi 0, %s72
      %s94 = sphi 0, %s96
      %s97 = sphi 0, %s94
      %s98 = sphi 0, %s97
      %s114 = sphi 0, %s98
      %s122 = sphi 0, %s124
      %s125 = sphi 0, %s122
      %s126 = sphi 0, %s125
      %s142 = sphi 0, %s126
      %s148 = sphi 0, %s150
      %s151 = sphi 0, %s148
      %s152 = sphi 0, %s151
      %s168 = sphi 0, %s152
      %s174 = sphi 0, %s176
      %s177 = sphi 0, %s174
      %s178 = sphi 0, %s177
      %s194 = sphi 0, %s178
    $region4: #{tpu_custom_call.1} parent=1 // loop_header_branch
      %21 = sbr.rel (%p19) target = $region8
    $region5: #{tpu_custom_call.1} parent=1 // loop_body
      %s23 = ssub.s32 %s18, 1
      %s24 = ssub.s32 %s18, 2
      %s31 = sadd.s32 1, %s26
      %p32 = scmp.ge.s32.totalorder %s31, 1
      %s33 = scalar_select %p32, 0, %s31
      %s34 = sadd.s32 1, %s25
      %s35 = scalar_select %p32, %s34, %s25
      %p36 = scmp.ge.s32.totalorder %s35, 2
      %s37 = scalar_select %p36, 0, %s35
      %s38 = sadd.s32 %s25, %s26
      %s39 = sadd.s32 %s37, %s33
      %s40 = ssub.s32 %s38, %s39
      %p41 = scmp.eq.s32.totalorder %s40, 0
      %s43 = sadd.s32 %s42, 1
      %s44 = scalar_select %p41, %s42, %s43
      %p47 = pneg %p41
      %p48 = scmp.eq.s32.totalorder %s18, 1
      %p49 = por %p47, %p48
      %p50 = scmp.ne.s32.totalorder %s42, %s45
      %p51 = scmp.eq.s32.totalorder %s18, 0
      %p52 = por %p50, %p51
      %p53 = scmp.ne.s32.totalorder %s42, %s45
      %p54 = scmp.eq.s32.totalorder %s23, 1
      %p55 = por %p53, %p54
      %p56 = scmp.ne.s32.totalorder %s45, %s46
      %p57 = scmp.eq.s32.totalorder %s23, 0
      %p58 = por %p56, %p57
      %p59 = scmp.ne.s32.totalorder %s45, %s46
      %p60 = scmp.eq.s32.totalorder %s24, 1
      %p61 = por %p59, %p60
      %p63 = scmp.ne.s32.totalorder %s46, %s62
      %p64 = scmp.eq.s32.totalorder %s24, 0
      %p65 = por %p63, %p64
      %s66 = ssub.s32 %s25, %s37
      %p67 = scmp.eq.s32.totalorder %s66, 0
      %s69 = sadd.s32 %s68, 1
      %s70 = scalar_select %p67, %s68, %s69
      %p73 = pneg %p67
      %p74 = scmp.eq.s32.totalorder %s18, 1
      %p75 = por %p73, %p74
      %p76 = scmp.ne.s32.totalorder %s68, %s71
      %p77 = scmp.eq.s32.totalorder %s18, 0
      %p78 = por %p76, %p77
      %p79 = scmp.ne.s32.totalorder %s68, %s71
      %p80 = scmp.eq.s32.totalorder %s23, 1
      %p81 = por %p79, %p80
      %p82 = scmp.ne.s32.totalorder %s71, %s72
      %p83 = scmp.eq.s32.totalorder %s23, 0
      %p84 = por %p82, %p83
      %p85 = scmp.ne.s32.totalorder %s71, %s72
      %p86 = scmp.eq.s32.totalorder %s24, 1
      %p87 = por %p85, %p86
      %p89 = scmp.ne.s32.totalorder %s72, %s88
      %p90 = scmp.eq.s32.totalorder %s24, 0
      %p91 = por %p89, %p90
      %s92 = ssub.s32 %s25, %s37
      %p93 = scmp.eq.s32.totalorder %s92, 0
      %s95 = sadd.s32 %s94, 1
      %s96 = scalar_select %p93, %s94, %s95
      %p99 = pneg %p93
      %p100 = scmp.eq.s32.totalorder %s18, 1
      %p101 = por %p99, %p100
      %p102 = scmp.ne.s32.totalorder %s94, %s97
      %p103 = scmp.eq.s32.totalorder %s18, 0
      %p104 = por %p102, %p103
      %p105 = scmp.ne.s32.totalorder %s94, %s97
      %p106 = scmp.eq.s32.totalorder %s23, 1
      %p107 = por %p105, %p106
      %p108 = scmp.ne.s32.totalorder %s97, %s98
      %p109 = scmp.eq.s32.totalorder %s23, 0
      %p110 = por %p108, %p109
      %p111 = scmp.ne.s32.totalorder %s97, %s98
      %p112 = scmp.eq.s32.totalorder %s24, 1
      %p113 = por %p111, %p112
      %p115 = scmp.ne.s32.totalorder %s98, %s114
      %p116 = scmp.eq.s32.totalorder %s24, 0
      %p117 = por %p115, %p116
      %s118 = sadd.s32 %s25, %s26
      %s119 = sadd.s32 %s37, %s33
      %s120 = ssub.s32 %s118, %s119
      %p121 = scmp.eq.s32.totalorder %s120, 0
      %s123 = sadd.s32 %s122, 1
      %s124 = scalar_select %p121, %s122, %s123
      %p127 = pneg %p121
      %p128 = scmp.eq.s32.totalorder %s18, 1
      %p129 = por %p127, %p128
      %p130 = scmp.ne.s32.totalorder %s122, %s125
      %p131 = scmp.eq.s32.totalorder %s18, 0
      %p132 = por %p130, %p131
      %p133 = scmp.ne.s32.totalorder %s122, %s125
      %p134 = scmp.eq.s32.totalorder %s23, 1
      %p135 = por %p133, %p134
      %p136 = scmp.ne.s32.totalorder %s125, %s126
      %p137 = scmp.eq.s32.totalorder %s23, 0
      %p138 = por %p136, %p137
      %p139 = scmp.ne.s32.totalorder %s125, %s126
      %p140 = scmp.eq.s32.totalorder %s24, 1
      %p141 = por %p139, %p140
      %p143 = scmp.ne.s32.totalorder %s126, %s142
      %p144 = scmp.eq.s32.totalorder %s24, 0
      %p145 = por %p143, %p144
      %s146 = ssub.s32 %s25, %s37
      %p147 = scmp.eq.s32.totalorder %s146, 0
      %s149 = sadd.s32 %s148, 1
      %s150 = scalar_select %p147, %s148, %s149
      %p153 = pneg %p147
      %p154 = scmp.eq.s32.totalorder %s18, 1
      %p155 = por %p153, %p154
      %p156 = scmp.ne.s32.totalorder %s148, %s151
      %p157 = scmp.eq.s32.totalorder %s18, 0
      %p158 = por %p156, %p157
      %p159 = scmp.ne.s32.totalorder %s148, %s151
      %p160 = scmp.eq.s32.totalorder %s23, 1
      %p161 = por %p159, %p160
      %p162 = scmp.ne.s32.totalorder %s151, %s152
      %p163 = scmp.eq.s32.totalorder %s23, 0
      %p164 = por %p162, %p163
      %p165 = scmp.ne.s32.totalorder %s151, %s152
      %p166 = scmp.eq.s32.totalorder %s24, 1
      %p167 = por %p165, %p166
      %p169 = scmp.ne.s32.totalorder %s152, %s168
      %p170 = scmp.eq.s32.totalorder %s24, 0
      %p171 = por %p169, %p170
      %s172 = ssub.s32 %s25, %s37
      %p173 = scmp.eq.s32.totalorder %s172, 0
      %s175 = sadd.s32 %s174, 1
      %s176 = scalar_select %p173, %s174, %s175
      %p179 = pneg %p173
      %p180 = scmp.eq.s32.totalorder %s18, 1
      %p181 = por %p179, %p180
      %p182 = scmp.ne.s32.totalorder %s174, %s177
      %p183 = scmp.eq.s32.totalorder %s18, 0
      %p184 = por %p182, %p183
      %p185 = scmp.ne.s32.totalorder %s174, %s177
      %p186 = scmp.eq.s32.totalorder %s23, 1
      %p187 = por %p185, %p186
      %p188 = scmp.ne.s32.totalorder %s177, %s178
      %p189 = scmp.eq.s32.totalorder %s23, 0
      %p190 = por %p188, %p189
      %p191 = scmp.ne.s32.totalorder %s177, %s178
      %p192 = scmp.eq.s32.totalorder %s24, 1
      %p193 = por %p191, %p192
      %p195 = scmp.ne.s32.totalorder %s178, %s194
      %p196 = scmp.eq.s32.totalorder %s24, 0
      %p197 = por %p195, %p196
      %p198 = scmp.le.s32.totalorder 1, %s18
      %p199 = scmp.lt.s32.totalorder %s18, 3
      %p200 = pnand %p198, %p199
      %p201 = pneg %p200
      // Predicated region
      $region9: #{tpu_custom_call.1} parent=5 // pred_check
        _
      $region10: #{tpu_custom_call.1} parent=5 // pred_check_branch
        %203 = sbr.rel (%p200) target = $region12
      $region11: #{tpu_custom_call.1} parent=5 // pred_region
        %s204 = ssub.s32 %s18, 1
      $region12: #{tpu_custom_call.1} parent=5 // pred_fallthru
        _
      %p205 = scmp.lt.s32.totalorder %s18, 2
      // Predicated region
      $region13: #{tpu_custom_call.1} parent=5 // pred_check
        %p206 = pneg %p205
      $region14: #{tpu_custom_call.1} parent=5 // pred_check_branch
        %208 = sbr.rel (%p206) target = $region16
      $region15: #{tpu_custom_call.1} parent=5 // pred_region
        // Predicated region
        $region17: #{tpu_custom_call.1} parent=15 // pred_check
          %p209 = pneg %p52
        $region18: #{tpu_custom_call.1} parent=15 // pred_check_branch
          %211 = sbr.rel (%p209) target = $region20
        $region19: #{tpu_custom_call.1} parent=15 // pred_region
          %s212 = sand.u32 %s42, 1
          %s213 = scalar_lea.sflag [#allocation3], %s212
          %s214 = sand.u32 %s42, 1
          %s215 = smul.addr %s214, 40
          %s216 = scalar_lea.vmem [#allocation2], %s215
          %s217 = sadd.s32 %s25, %s26
          %s218 = smul.u32 2, %s217
          %s220 = ssub.s32 640, 640
          %221 = vsyncadd %s213, %s220
          %s222 = smul.addr %s218, 64
          %s223 = scalar_lea.hbm %s0, %s222
          %s224 = sshll.u32 %s216, 4
          %s225 = int_to_ptr.vmem [resolvable:$true] %s224
          %230 = dma.hbm_to_vmem [thread:$0]  %s223, 640, %s225, %s213, 256, 128, 8
        $region20: #{tpu_custom_call.1} parent=15 // pred_fallthru
          _
        // Predicated region
        $region21: #{tpu_custom_call.1} parent=15 // pred_check
          %p231 = pneg %p78
        $region22: #{tpu_custom_call.1} parent=15 // pred_check_branch
          %233 = sbr.rel (%p231) target = $region24
        $region23: #{tpu_custom_call.1} parent=15 // pred_region
          %p234 = scmp.lt.s32.totalorder %s25, 1
          %s235 = scalar_select %p234, %s25, 1
          %s236 = smul.addr %s235, 4
          %s237 = scalar_lea.vmem %s1, %s236
        $region24: #{tpu_custom_call.1} parent=15 // pred_fallthru
          _
        // Predicated region
        $region25: #{tpu_custom_call.1} parent=15 // pred_check
          %p238 = pneg %p104
        $region26: #{tpu_custom_call.1} parent=15 // pred_check_branch
          %240 = sbr.rel (%p238) target = $region28
        $region27: #{tpu_custom_call.1} parent=15 // pred_region
          %p241 = scmp.lt.s32.totalorder %s25, 1
          %s242 = scalar_select %p241, %s25, 1
          %s243 = smul.addr %s242, 8
          %s244 = scalar_lea.vmem %s2, %s243
        $region28: #{tpu_custom_call.1} parent=15 // pred_fallthru
          _
      $region16: #{tpu_custom_call.1} parent=5 // pred_fallthru
        _
      %p245 = scmp.le.s32.totalorder 1, %s18
      %p246 = scmp.lt.s32.totalorder %s18, 3
      %p247 = pnand %p245, %p246
      %p248 = pneg %p247
      // Predicated region
      $region29: #{tpu_custom_call.1} parent=5 // pred_check
        _
      $region30: #{tpu_custom_call.1} parent=5 // pred_check_branch
        %250 = sbr.rel (%p247) target = $region32
      $region31: #{tpu_custom_call.1} parent=5 // pred_region
        %s251 = ssub.s32 %s18, 1
        %s252 = sand.u32 %s45, 1
        %s253 = scalar_lea.sflag [#allocation3], %s252
        %s254 = sand.u32 %s45, 1
        %s255 = smul.addr %s254, 40
        %s256 = scalar_lea.vmem [#allocation2], %s255
        // Predicated region
        $region33: #{tpu_custom_call.1} parent=31 // pred_check
          %p257 = pneg %p58
        $region34: #{tpu_custom_call.1} parent=31 // pred_check_branch
          %259 = sbr.rel (%p257) target = $region36
        $region35: #{tpu_custom_call.1} parent=31 // pred_region
          %260 = dma.done %s253, 640
        $region36: #{tpu_custom_call.1} parent=31 // pred_fallthru
          _
        %s261 = sand.u32 %s45, 1
        %s262 = scalar_lea.sflag [#allocation3], %s261
        %s263 = sand.u32 %s45, 1
        %s264 = smul.addr %s263, 40
        %s265 = scalar_lea.vmem [#allocation2], %s264
        %p266 = pneg %p58
        %p267 = pneg %p55
        %p268 = scmp.lt.s32.totalorder %s27, 1
        %s269 = scalar_select %p268, %s27, 1
        %s270 = smul.addr %s269, 4
        %s271 = scalar_lea.vmem %s1, %s270
        %p272 = pneg %p84
        %p273 = pneg %p81
        %p274 = scmp.lt.s32.totalorder %s27, 1
        %s275 = scalar_select %p274, %s27, 1
        %s276 = smul.addr %s275, 8
        %s277 = scalar_lea.vmem %s2, %s276
        %p278 = pneg %p110
        %p279 = pneg %p107
        %p280 = pneg %p138
        %p281 = pneg %p135
        %s282 = sand.u32 %s125, 1
        %s283 = scalar_lea.sflag [#allocation4], %s282
        %s284 = sand.u32 %s125, 1
        %s285 = smul.addr %s284, 16
        %s286 = scalar_lea.vmem [#allocation5], %s285
        %p287 = pneg %p164
        %p288 = pneg %p161
        %p289 = scmp.lt.s32.totalorder %s27, 1
        %s290 = scalar_select %p289, %s27, 1
        %s291 = smul.addr %s290, 8
        %s292 = scalar_lea.vmem %s4, %s291
        %p293 = pneg %p190
        %p294 = pneg %p187
        %p295 = scmp.lt.s32.totalorder %s27, 1
        %s296 = scalar_select %p295, %s27, 1
        %s297 = smul.addr %s296, 8
        %s298 = scalar_lea.vmem %s5, %s297
        %s299 = sadd.s32 %s27, %s28
        %s300 = smul.u32 2, %s299
        %p301 = scmp.lt.s32.totalorder %s27, 1
        %s302 = scalar_select %p301, %s27, 1
        %s303 = smul.addr %s302, 4
        %s304 = scalar_lea.vmem %s1, %s303
        %p305 = scmp.lt.s32.totalorder %s27, 1
        %s306 = scalar_select %p305, %s27, 1
        %s307 = smul.addr %s306, 8
        %s308 = scalar_lea.vmem %s2, %s307
        %s309 = sadd.s32 %s27, %s28
        %s310 = smul.u32 2, %s309
        %p311 = scmp.lt.s32.totalorder %s27, 1
        %s312 = scalar_select %p311, %s27, 1
        %s313 = smul.addr %s312, 8
        %s314 = scalar_lea.vmem %s4, %s313
        %p315 = scmp.lt.s32.totalorder %s27, 1
        %s316 = scalar_select %p315, %s27, 1
        %s317 = smul.addr %s316, 8
        %s318 = scalar_lea.vmem %s5, %s317
        %p320 = scmp.eq.s32.totalorder %s28, 0
        // Predicated region
        $region37: #{tpu_custom_call.1} parent=31 // pred_check
          %p321 = pneg %p320
        $region38: #{tpu_custom_call.1} parent=31 // pred_check_branch
          %323 = sbr.rel (%p321) target = $region40
        $region39: #{tpu_custom_call.1} parent=31 // pred_region
          %vm324 = vcmask 7168
          %325 = vst.msk [vmem:[%s314] sm:$0xff] %vm324, 0.0
          %326 = vst.msk [vmem:[%s318] sm:$0xff] %vm324, 0.0
        $region40: #{tpu_custom_call.1} parent=31 // pred_fallthru
          _
        %v327 = vld [vmem:[%s304] sm:$0xf]
        %v328 = vld [vmem:[%s256] sm:$0xff]
        %v329 = vld [vmem:[%s256 + $0x8] sm:$0xff]
        %v330 = vld [vmem:[%s256 + $0x10] sm:$0xff]
        %v331 = vld [vmem:[%s256 + $0x18] sm:$0xff]
        %v332 = vld [vmem:[%s256 + $0x20] sm:$0xff]
        %v333 = vld [vmem:[%s308] sm:$0xff]
        %335 = vset.pattern.permute.xlu0 0
        %336 = vperm.xlu0 %335, %v333
        %v337 = vpop.permute.xlu0 %336
        %v344 = vunpack.c.l.b16 %v328
        %v345 = vunpack.c.h.b16 %v328
        %v346 = vunpack.c.l.b16 %v329
        %v347 = vunpack.c.h.b16 %v329
        %v348 = vunpack.c.l.b16 %v330
        %v349 = vunpack.c.h.b16 %v330
        %v350 = vunpack.c.l.b16 %v331
        %v351 = vunpack.c.h.b16 %v331
        %v352 = vunpack.c.l.b16 %v332
        %v353 = vunpack.c.h.b16 %v332
        %v354 = vpack.c.b16 %v346, %v344
        %v355 = vpack.c.b16 %v347, %v345
        %v356 = vpack.c.b16 %v350, %v348
        %v357 = vpack.c.b16 %v351, %v349
        %v358 = vpack.c.b16 %v352, %v352
        %v359 = vpack.c.b16 %v353, %v353
        %vm364 = vcmask 326656
        %v366 = vsel %vm364, %v327, 0
        %vm368 = vcmask 1043456
        %v370 = vsel %vm368, %v358, 0
        %v373 = vsel %vm368, %v359, 0
        %375 = vmatprep.subr.bf16.mxu0 %v355
        %376 = vmatpush1.bf16.msra.mxu0 %v354
        %377 = vmatprep.subr.bf16.mxu0 %v357
        %378 = vmatpush1.bf16.msra.mxu0 %v356
        %379 = vmatprep.subr.bf16.mxu0 %v373
        %380 = vmatpush1.bf16.msra.mxu0 %v370
        %381 = vmatprep.subr.bf16.mxu0 0
        %382 = vmatpush1.bf16.msra.mxu0 0
        %383 = vmatprep.subr.bf16.mxu0 0
        %384 = vmatpush1.bf16.msra.mxu0 0
        %385 = vmatprep.subr.bf16.mxu0 0
        %386 = vmatpush1.bf16.msra.mxu0 0
        %387 = vmatprep.subr.bf16.mxu0 0
        %388 = vmatpush1.bf16.msra.mxu0 0
        %389 = vmatprep.subr.bf16.mxu0 0
        %390 = vmatpush1.bf16.msra.mxu0 0
        %391 = vmatprep.subr.bf16.mxu0 0
        %392 = vmatpush1.bf16.msra.mxu0 0
        %393 = vmatprep.subr.bf16.mxu0 0
        %394 = vmatpush1.bf16.msra.mxu0 0
        %395 = vmatprep.subr.bf16.mxu0 0
        %396 = vmatpush1.bf16.msra.mxu0 0
        %397 = vmatprep.subr.bf16.mxu0 0
        %398 = vmatpush1.bf16.msra.mxu0 0
        %399 = vmatprep.subr.bf16.mxu0 0
        %400 = vmatpush1.bf16.msra.mxu0 0
        %401 = vmatprep.subr.bf16.mxu0 0
        %402 = vmatpush1.bf16.msra.mxu0 0
        %403 = vmatprep.subr.bf16.mxu0 0
        %404 = vmatpush1.bf16.msra.mxu0 0
        %405 = vmatprep.subr.bf16.mxu0 0
        %406 = vmatpush1.bf16.msra.mxu0 0
        %407 = vmatprep.mubr.bf16.mxu0 0
        %408 = vmatmul.mubr.bf16.gmra.mrb[0].mxu0 %v366
        %v409 = vpop.f32.mrb[0].mxu0
        %v410 = vadd.f32 %v337, %v409
        %v411 = vpop.f32.mrb[0].mxu0
        %v412 = vadd.f32 %v337, %v411
        %v413 = vpop.f32.mrb[0].mxu0
        %v414 = vpop.f32.mrb[0].mxu0
        %415 = vdwg.mxu0
        %416 = vst [vmem:[%s286] sm:$0xff] %v410
        %417 = vst [vmem:[%s286 + $0x8] sm:$0xff] %v412
        %v418 = vld [vmem:[%s314] sm:$0xff]
        %v419 = vadd.f32 %v410, %v412
        %420 = vadd.xlane.f32.xlu0 %v419
        %v421 = vpop.xlane.xlu0 %420
        %v422 = vadd.f32 %v418, %v421
        %vm423 = vcmask 7168
        %424 = vst.msk [vmem:[%s314] sm:$0xff] %vm423, %v422
        %v425 = vld [vmem:[%s318] sm:$0xff]
        %v426 = vmul.f32 %v410, %v410
        %v427 = vmul.f32 %v412, %v412
        %v428 = vadd.f32 %v426, %v427
        %429 = vadd.xlane.f32.xlu0 %v428
        %v430 = vpop.xlane.xlu0 %429
        %v431 = vadd.f32 %v425, %v430
        %432 = vst.msk [vmem:[%s318] sm:$0xff] %vm423, %v431
        %s433 = sand.u32 %s125, 1
        %s434 = scalar_lea.sflag [#allocation4], %s433
        %s435 = sand.u32 %s125, 1
        %s436 = smul.addr %s435, 16
        %s437 = scalar_lea.vmem [#allocation5], %s436
        %p438 = scmp.lt.s32.totalorder %s27, 1
        %s439 = scalar_select %p438, %s27, 1
        %s440 = smul.addr %s439, 8
        %s441 = scalar_lea.vmem %s4, %s440
        %p442 = scmp.lt.s32.totalorder %s27, 1
        %s443 = scalar_select %p442, %s27, 1
        %s444 = smul.addr %s443, 8
        %s445 = scalar_lea.vmem %s5, %s444
        // Predicated region
        $region41: #{tpu_custom_call.1} parent=31 // pred_check
          %p446 = pneg %p135
        $region42: #{tpu_custom_call.1} parent=31 // pred_check_branch
          %448 = sbr.rel (%p446) target = $region44
        $region43: #{tpu_custom_call.1} parent=31 // pred_region
          %s449 = sadd.s32 %s27, %s28
          %s450 = smul.u32 2, %s449
          %s452 = ssub.s32 256, 256
          %453 = vsyncadd %s434, %s452
          %s454 = smul.addr %s450, 128
          %s455 = scalar_lea.hbm %s3, %s454
          %s457 = sshll.u32 %s437, 4
          %s458 = int_to_ptr.vmem [resolvable:$true] %s457
          %460 = dma.vmem_to_hbm [thread:$0]  %s458, 256, %s455, %s434
        $region44: #{tpu_custom_call.1} parent=31 // pred_fallthru
          _
        // Predicated region
        $region45: #{tpu_custom_call.1} parent=31 // pred_check
          %p461 = pneg %p161
        $region46: #{tpu_custom_call.1} parent=31 // pred_check_branch
          %463 = sbr.rel (%p461) target = $region48
        $region47: #{tpu_custom_call.1} parent=31 // pred_region
          _
        $region48: #{tpu_custom_call.1} parent=31 // pred_fallthru
          _
        // Predicated region
        $region49: #{tpu_custom_call.1} parent=31 // pred_check
          %p464 = pneg %p187
        $region50: #{tpu_custom_call.1} parent=31 // pred_check_branch
          %466 = sbr.rel (%p464) target = $region52
        $region51: #{tpu_custom_call.1} parent=31 // pred_region
          _
        $region52: #{tpu_custom_call.1} parent=31 // pred_fallthru
          _
      $region32: #{tpu_custom_call.1} parent=5 // pred_fallthru
        _
      %p467 = scmp.le.s32.totalorder 2, %s18
      // Predicated region
      $region53: #{tpu_custom_call.1} parent=5 // pred_check
        %p468 = pneg %p467
      $region54: #{tpu_custom_call.1} parent=5 // pred_check_branch
        %470 = sbr.rel (%p468) target = $region56
      $region55: #{tpu_custom_call.1} parent=5 // pred_region
        %s471 = ssub.s32 %s18, 2
        // Predicated region
        $region57: #{tpu_custom_call.1} parent=55 // pred_check
          %p472 = pneg %p141
        $region58: #{tpu_custom_call.1} parent=55 // pred_check_branch
          %474 = sbr.rel (%p472) target = $region60
        $region59: #{tpu_custom_call.1} parent=55 // pred_region
          %s475 = sand.u32 %s126, 1
          %s476 = scalar_lea.sflag [#allocation4], %s475
          %s477 = sand.u32 %s126, 1
          %s478 = smul.addr %s477, 16
          %s479 = scalar_lea.vmem [#allocation5], %s478
          %480 = dma.done %s476, 256
        $region60: #{tpu_custom_call.1} parent=55 // pred_fallthru
          _
        // Predicated region
        $region61: #{tpu_custom_call.1} parent=55 // pred_check
          %p481 = pneg %p167
        $region62: #{tpu_custom_call.1} parent=55 // pred_check_branch
          %483 = sbr.rel (%p481) target = $region64
        $region63: #{tpu_custom_call.1} parent=55 // pred_region
          %p484 = scmp.lt.s32.totalorder %s29, 1
          %s485 = scalar_select %p484, %s29, 1
          %s486 = smul.addr %s485, 8
          %s487 = scalar_lea.vmem %s4, %s486
        $region64: #{tpu_custom_call.1} parent=55 // pred_fallthru
          _
        // Predicated region
        $region65: #{tpu_custom_call.1} parent=55 // pred_check
          %p488 = pneg %p193
        $region66: #{tpu_custom_call.1} parent=55 // pred_check_branch
          %490 = sbr.rel (%p488) target = $region68
        $region67: #{tpu_custom_call.1} parent=55 // pred_region
          %p491 = scmp.lt.s32.totalorder %s29, 1
          %s492 = scalar_select %p491, %s29, 1
          %s493 = smul.addr %s492, 8
          %s494 = scalar_lea.vmem %s5, %s493
        $region68: #{tpu_custom_call.1} parent=55 // pred_fallthru
          _
      $region56: #{tpu_custom_call.1} parent=5 // pred_fallthru
        _
    $region6: #{tpu_custom_call.1} parent=1 // loop_footer
      %s22 = sadd.s32 1, %s18
    $region7: #{tpu_custom_call.1} parent=1 // loop_footer_branch
      %17 = sbr.rel target = $region3
    $region8: #{tpu_custom_call.1} parent=1 // loop_exit
      _
    %495 = vsyncpa [#allocation3], 1
    %s496 = scalar_lea.sflag [#allocation3], 1
    %497 = vsyncpa %s496, 1
    %498 = vsyncpa [#allocation4], 1
    %s499 = scalar_lea.sflag [#allocation4], 1
    %500 = vsyncpa %s499, 1

</llo_original>
